<compile_context>
chip_gen: v5e
topology: v5e:2x2
jax: 0.10.0
libtpu: 0.0.40
codegen_flags: <defaults>
</compile_context>

<pallas_src>
import functools

import jax
import jax.numpy as jnp
from jax.experimental import pallas as pl
from jax.experimental.pallas import tpu as pltpu


def _round_up(x, m):
    return (x + m - 1) // m * m


def _tpu_generation():
    try:
        kind = jax.devices()[0].device_kind.lower()
    except Exception:
        return 6
    for g in (7, 6, 5, 4):
        if f"v{g}" in kind:
            return g
    return 6


def _default_act_dtype(gen=None):
    gen = _tpu_generation() if gen is None else gen
    # v5e has no bf16 VPU/EUP path -> keep the SiLU in f32 there.
    return jnp.float32 if gen <= 5 else jnp.bfloat16


def critic_kernel(x_ref, w1_ref, b1_ref, w2_ref, b2_ref, w3_ref, b3_ref, o_ref,
                  *, act_dtype):
    # x arrives as f32 (avoids an extra HBM pass in the wrapper); cast for MXU.
    x = x_ref[...].astype(jnp.bfloat16)

    # layer 1: bf16 MXU operands, f32 accumulation; bias add in f32, SiLU in
    # act_dtype (bf16 on v6e/v7x, f32 on v5e).
    h = jnp.dot(x, w1_ref[...], preferred_element_type=jnp.float32)
    h = (h + b1_ref[...]).astype(act_dtype)
    h = h * jax.nn.sigmoid(h)                      # SiLU

    # layer 2
    h = jnp.dot(h.astype(jnp.bfloat16), w2_ref[...],
                preferred_element_type=jnp.float32)
    h = (h + b2_ref[...]).astype(act_dtype)
    h = h * jax.nn.sigmoid(h)

    # layer 3 (no activation)
    out = jnp.dot(h.astype(jnp.bfloat16), w3_ref[...],
                  preferred_element_type=jnp.float32)
    out = out + b3_ref[...]
    o_ref[...] = out.astype(o_ref.dtype)


def prepare_critic_params(params):
    """One-time pad (lane dims -> multiples of 128) + bf16 cast of the weights.

    params: (w1, b1, w2, b2, w3, b3) with W stored (in, out) so y = x @ W + b.
    Reuse the returned dict across forward calls.
    """
    w1, b1, w2, b2, w3, b3 = params
    in_dim, h1_dim = w1.shape
    h2_dim, out_dim = w3.shape
    in_p = _round_up(in_dim, 128)
    h1_p = _round_up(h1_dim, 128)
    h2_p = _round_up(h2_dim, 128)
    out_p = _round_up(out_dim, 128)

    def pad2(a, rows, cols, dtype):
        a = a.astype(dtype)
        return jnp.pad(a, ((0, rows - a.shape[0]), (0, cols - a.shape[1])))

    return dict(
        w1=pad2(w1, in_p, h1_p, jnp.bfloat16),
        b1=pad2(b1.reshape(1, -1), 1, h1_p, jnp.float32),
        w2=pad2(w2, h1_p, h2_p, jnp.bfloat16),
        b2=pad2(b2.reshape(1, -1), 1, h2_p, jnp.float32),
        w3=pad2(w3, h2_p, out_p, jnp.bfloat16),
        b3=pad2(b3.reshape(1, -1), 1, out_p, jnp.float32),
        in_dim=in_dim,
        out_dim=out_dim,
    )


def critic_forward(x, params, *, block_batch=None, act_dtype=None,
                   out_dtype=jnp.float32):
    """x: (B, input_size) f32.  params: raw 6-tuple or prepare_critic_params() dict."""
    if isinstance(params, (tuple, list)):
        params = prepare_critic_params(params)
    w1p, b1p, w2p, b2p, w3p, b3p = (params["w1"], params["b1"], params["w2"],
                                    params["b2"], params["w3"], params["b3"])
    in_dim, out_dim = params["in_dim"], params["out_dim"]
    in_p, h1_p = w1p.shape
    h2_p, out_p = w3p.shape

    B, x_in = x.shape
    assert x_in == in_dim, (x_in, in_dim)
    out_itemsize = jnp.dtype(out_dtype).itemsize

    gen = _tpu_generation()
    if act_dtype is None:
        act_dtype = _default_act_dtype(gen)

    # ---- batch-tile selection -------------------------------------------------
    if block_batch is None:
        # Per-generation VMEM budget (headroom below the explicit scoped limit).
        budget = {5: 40, 6: 48, 7: 32}.get(gen, 32) * 1024 * 1024
        # Resident weights/biases are (conservatively) double-buffered by Pallas.
        weight_bytes = 2 * (w1p.size * 2 + w2p.size * 2 + w3p.size * 2
                            + (b1p.size + b2p.size + b3p.size) * 4)
        avail = max(budget - weight_bytes, 2 * 1024 * 1024)
        # Per-row footprint: double-buffered f32 x tile + out tile, plus f32
        # intermediate activations (single-buffered temporaries).
        per_row = 2 * (in_p * 4 + out_p * out_itemsize) + (h1_p + h2_p) * 4
        tb = avail // max(per_row, 1)
        tb = max(16, min(2048, tb))
        if B >= 32:
            # Guarantee >= 2 grid steps so the "parallel" batch axis can be
            # sharded across both TensorCores on v7x.
            tb = min(tb, _round_up(-(-B // 2), 16))
        block_batch = _round_up(min(tb, max(B, 16)), 16)
    TB = block_batch
    B_p = _round_up(B, TB)

    # x stays f32 in HBM (cast to bf16 in-kernel); pad only when actually needed.
    if B_p == B and in_p == in_dim:
        xp = x
    else:
        xp = jnp.pad(x, ((0, B_p - B), (0, in_p - in_dim)))

    grid = (B_p // TB,)

    def resident(shape):
        return pl.BlockSpec(shape, lambda i: (0,) * len(shape))
    # TODO(synk): for very large final_out (output_size**n), add a second grid
    # axis over out_p (and/or single-buffer the resident weights) so w3 does
    # not have to be fully VMEM-resident.

    vmem_limit = {5: 64, 6: 64, 7: 48}.get(gen, 48) * 1024 * 1024

    flops = 2 * B_p * (in_p * h1_p + h1_p * h2_p + h2_p * out_p)
    transcendentals = B_p * (h1_p + h2_p)
    bytes_accessed = (
        xp.size * 4
        + w1p.size * 2 + w2p.size * 2 + w3p.size * 2
        + (b1p.size + b2p.size + b3p.size) * 4
        + B_p * out_p * out_itemsize
    )

    kernel = functools.partial(critic_kernel, act_dtype=act_dtype)

    out = pl.pallas_call(
        kernel,
        out_shape=jax.ShapeDtypeStruct((B_p, out_p), out_dtype),
        grid=grid,
        in_specs=[
            pl.BlockSpec((TB, in_p), lambda i: (i, 0)),   # x tile (pipelined)
            resident((in_p, h1_p)),                       # w1 (VMEM-resident)
            resident((1, h1_p)),                          # b1
            resident((h1_p, h2_p)),                       # w2
            resident((1, h2_p)),                          # b2
            resident((h2_p, out_p)),                      # w3
            resident((1, out_p)),                         # b3
        ],
        out_specs=pl.BlockSpec((TB, out_p), lambda i: (i, 0)),
        compiler_params=pltpu.CompilerParams(
            dimension_semantics=("parallel",),
            vmem_limit_bytes=vmem_limit),
        cost_estimate=pl.CostEstimate(
            flops=flops,
            transcendentals=transcendentals,
            bytes_accessed=bytes_accessed),
    )(xp, w1p, b1p, w2p, b2p, w3p, b3p)

    return out[:B, :out_dim]


def init_critic_params(key, input_size, output_size, hidden_size=128, n=3):
    """Mirrors weights_init_ for SiLU: Xavier-normal weights (gain=1), zero biases.
    Weights stored transposed vs. PyTorch, i.e. shape (in, out), so x @ W + b."""
    out_total = int(jnp.sum(jnp.asarray(output_size)))
    final_out = out_total ** n

    def xavier_normal(k, fan_in, fan_out):
        std = (2.0 / (fan_in + fan_out)) ** 0.5
        return std * jax.random.normal(k, (fan_in, fan_out), dtype=jnp.float32)

    k1, k2, k3 = jax.random.split(key, 3)
    w1 = xavier_normal(k1, input_size, hidden_size)
    b1 = jnp.zeros((hidden_size,), jnp.float32)
    w2 = xavier_normal(k2, hidden_size, 2 * hidden_size)
    b2 = jnp.zeros((2 * hidden_size,), jnp.float32)
    w3 = xavier_normal(k3, 2 * hidden_size, final_out)
    b3 = jnp.zeros((final_out,), jnp.float32)
    return (w1, b1, w2, b2, w3, b3)


def critic_ref(x, params, act_dtype=jnp.float32):
    """Pure-JAX reference with the same bf16-operand / f32-accumulate / act_dtype-SiLU numerics."""
    w1, b1, w2, b2, w3, b3 = params

    def mm(a, w):
        return jnp.dot(a.astype(jnp.bfloat16), w.astype(jnp.bfloat16),
                       preferred_element_type=jnp.float32)

    h = (mm(x, w1) + b1.reshape(1, -1)).astype(act_dtype)
    h = h * jax.nn.sigmoid(h)
    h = (mm(h, w2) + b2.reshape(1, -1)).astype(act_dtype)
    h = h * jax.nn.sigmoid(h)
    return (mm(h, w3) + b3.reshape(1, -1)).astype(jnp.float32)


if __name__ == "__main__":
    # Small shapes consistent with the module:
    #   input_size=32, output_size=4, hidden_size=32, n=3 -> final out dim = 4**3 = 64
    batch = 8
    input_size = 32
    output_size = 4
    hidden_size = 32
    n = 3

    key = jax.random.PRNGKey(0)
    kx, kp = jax.random.split(key)
    x = jax.random.normal(kx, (batch, input_size), dtype=jnp.float32)
    params = init_critic_params(kp, input_size, output_size, hidden_size, n)

    prepared = prepare_critic_params(params)   # one-time weight pad/cast
    act_dtype = _default_act_dtype()

    y = critic_forward(x, prepared, act_dtype=act_dtype)
    y = jax.block_until_ready(y)

    y_ref = critic_ref(x, params, act_dtype=act_dtype)
    assert y.shape == (batch, output_size ** n), y.shape
    max_err = float(jnp.max(jnp.abs(y - y_ref)))
    assert jnp.allclose(y, y_ref, atol=2e-2, rtol=2e-2), max_err

    print("KERNEL_OK")
</pallas_src>

<mosaic_0001>
module attributes {stable_mosaic.version = 11 : i64} {
  func.func @critic_kernel(%arg0: i32, %arg1: memref<16x128xf32, #tpu.memory_space<vmem>>, %arg2: memref<128x128xbf16, #tpu.memory_space<vmem>>, %arg3: memref<1x128xf32, #tpu.memory_space<vmem>>, %arg4: memref<128x128xbf16, #tpu.memory_space<vmem>>, %arg5: memref<1x128xf32, #tpu.memory_space<vmem>>, %arg6: memref<128x128xbf16, #tpu.memory_space<vmem>>, %arg7: memref<1x128xf32, #tpu.memory_space<vmem>>, %arg8: memref<16x128xf32, #tpu.memory_space<vmem>>) attributes {dimension_semantics = [#tpu.dimension_semantics<parallel>], iteration_bounds = array<i64: 1>, scalar_prefetch = 0 : i64, scratch_operands = 0 : i64, tpu.core_type = #tpu.core_type<tc>, window_params = [{transform_indices = @transform_0, window_bounds = array<i64: 16, 128>}, {pipeline_mode = #tpu.pipeline_mode<synchronous>, transform_indices = @transform_1, window_bounds = array<i64: 128, 128>}, {pipeline_mode = #tpu.pipeline_mode<synchronous>, transform_indices = @transform_2, window_bounds = array<i64: 1, 128>}, {pipeline_mode = #tpu.pipeline_mode<synchronous>, transform_indices = @transform_3, window_bounds = array<i64: 128, 128>}, {pipeline_mode = #tpu.pipeline_mode<synchronous>, transform_indices = @transform_4, window_bounds = array<i64: 1, 128>}, {pipeline_mode = #tpu.pipeline_mode<synchronous>, transform_indices = @transform_5, window_bounds = array<i64: 128, 128>}, {pipeline_mode = #tpu.pipeline_mode<synchronous>, transform_indices = @transform_6, window_bounds = array<i64: 1, 128>}, {transform_indices = @transform_7, window_bounds = array<i64: 16, 128>}]} {
    %c0 = arith.constant 0 : index
    %c0_0 = arith.constant 0 : index
    %0 = vector.load %arg1[%c0, %c0_0] : memref<16x128xf32, #tpu.memory_space<vmem>>, vector<16x128xf32>
    %1 = arith.truncf %0 : vector<16x128xf32> to vector<16x128xbf16>
    %c0_1 = arith.constant 0 : index
    %c0_2 = arith.constant 0 : index
    %2 = vector.load %arg2[%c0_1, %c0_2] : memref<128x128xbf16, #tpu.memory_space<vmem>>, vector<128x128xbf16>
    %cst = arith.constant dense<0.000000e+00> : vector<16x128xf32>
    %3 = tpu.matmul %1, %2, %cst {dimension_numbers = #tpu.dot_dimension_numbers<[1], [0], [0], [1], [0, 0, 1, 1], [], []>} : vector<16x128xbf16>, vector<128x128xbf16>, vector<16x128xf32> -> vector<16x128xf32>
    %c0_3 = arith.constant 0 : index
    %c0_4 = arith.constant 0 : index
    %4 = vector.load %arg3[%c0_3, %c0_4] : memref<1x128xf32, #tpu.memory_space<vmem>>, vector<1x128xf32>
    %5 = vector.broadcast %4 : vector<1x128xf32> to vector<16x128xf32>
    %6 = arith.addf %3, %5 : vector<16x128xf32>
    %7 = arith.truncf %6 : vector<16x128xf32> to vector<16x128xbf16>
    %8 = arith.negf %7 : vector<16x128xbf16>
    %9 = math.exp %8 : vector<16x128xbf16>
    %cst_5 = arith.constant 1.000000e+00 : bf16
    %10 = vector.broadcast %cst_5 : bf16 to vector<16x128xbf16>
    %11 = arith.addf %10, %9 : vector<16x128xbf16>
    %12 = arith.divf %10, %11 : vector<16x128xbf16>
    %13 = arith.mulf %7, %12 : vector<16x128xbf16>
    %c0_6 = arith.constant 0 : index
    %c0_7 = arith.constant 0 : index
    %14 = vector.load %arg4[%c0_6, %c0_7] : memref<128x128xbf16, #tpu.memory_space<vmem>>, vector<128x128xbf16>
    %cst_8 = arith.constant dense<0.000000e+00> : vector<16x128xf32>
    %15 = tpu.matmul %13, %14, %cst_8 {dimension_numbers = #tpu.dot_dimension_numbers<[1], [0], [0], [1], [0, 0, 1, 1], [], []>} : vector<16x128xbf16>, vector<128x128xbf16>, vector<16x128xf32> -> vector<16x128xf32>
    %c0_9 = arith.constant 0 : index
    %c0_10 = arith.constant 0 : index
    %16 = vector.load %arg5[%c0_9, %c0_10] : memref<1x128xf32, #tpu.memory_space<vmem>>, vector<1x128xf32>
    %17 = vector.broadcast %16 : vector<1x128xf32> to vector<16x128xf32>
    %18 = arith.addf %15, %17 : vector<16x128xf32>
    %19 = arith.truncf %18 : vector<16x128xf32> to vector<16x128xbf16>
    %20 = arith.negf %19 : vector<16x128xbf16>
    %21 = math.exp %20 : vector<16x128xbf16>
    %cst_11 = arith.constant 1.000000e+00 : bf16
    %22 = vector.broadcast %cst_11 : bf16 to vector<16x128xbf16>
    %23 = arith.addf %22, %21 : vector<16x128xbf16>
    %24 = arith.divf %22, %23 : vector<16x128xbf16>
    %25 = arith.mulf %19, %24 : vector<16x128xbf16>
    %c0_12 = arith.constant 0 : index
    %c0_13 = arith.constant 0 : index
    %26 = vector.load %arg6[%c0_12, %c0_13] : memref<128x128xbf16, #tpu.memory_space<vmem>>, vector<128x128xbf16>
    %cst_14 = arith.constant dense<0.000000e+00> : vector<16x128xf32>
    %27 = tpu.matmul %25, %26, %cst_14 {dimension_numbers = #tpu.dot_dimension_numbers<[1], [0], [0], [1], [0, 0, 1, 1], [], []>} : vector<16x128xbf16>, vector<128x128xbf16>, vector<16x128xf32> -> vector<16x128xf32>
    %c0_15 = arith.constant 0 : index
    %c0_16 = arith.constant 0 : index
    %28 = vector.load %arg7[%c0_15, %c0_16] : memref<1x128xf32, #tpu.memory_space<vmem>>, vector<1x128xf32>
    %29 = vector.broadcast %28 : vector<1x128xf32> to vector<16x128xf32>
    %30 = arith.addf %27, %29 : vector<16x128xf32>
    %c0_17 = arith.constant 0 : index
    %c0_18 = arith.constant 0 : index
    %31 = vector.load %arg8[%c0_17, %c0_18] : memref<16x128xf32, #tpu.memory_space<vmem>>, vector<16x128xf32>
    tpu.vector_store %arg8[%c0_17, %c0_18], %30 {strides = array<i32>} : memref<16x128xf32, #tpu.memory_space<vmem>>, vector<16x128xf32>,
    return
  }
  func.func @transform_0(%arg0: i32) -> (i32, i32) {
    %c0_i32 = arith.constant 0 : i32
    %c0_i32_0 = arith.constant 0 : i32
    return %arg0, %c0_i32 : i32, i32
  }
  func.func @transform_1(%arg0: i32) -> (i32, i32) {
    %c0_i32 = arith.constant 0 : i32
    %c0_i32_0 = arith.constant 0 : i32
    %c0_i32_1 = arith.constant 0 : i32
    return %c0_i32, %c0_i32_0 : i32, i32
  }
  func.func @transform_2(%arg0: i32) -> (i32, i32) {
    %c0_i32 = arith.constant 0 : i32
    %c0_i32_0 = arith.constant 0 : i32
    %c0_i32_1 = arith.constant 0 : i32
    return %c0_i32, %c0_i32_0 : i32, i32
  }
  func.func @transform_3(%arg0: i32) -> (i32, i32) {
    %c0_i32 = arith.constant 0 : i32
    %c0_i32_0 = arith.constant 0 : i32
    %c0_i32_1 = arith.constant 0 : i32
    return %c0_i32, %c0_i32_0 : i32, i32
  }
  func.func @transform_4(%arg0: i32) -> (i32, i32) {
    %c0_i32 = arith.constant 0 : i32
    %c0_i32_0 = arith.constant 0 : i32
    %c0_i32_1 = arith.constant 0 : i32
    return %c0_i32, %c0_i32_0 : i32, i32
  }
  func.func @transform_5(%arg0: i32) -> (i32, i32) {
    %c0_i32 = arith.constant 0 : i32
    %c0_i32_0 = arith.constant 0 : i32
    %c0_i32_1 = arith.constant 0 : i32
    return %c0_i32, %c0_i32_0 : i32, i32
  }
  func.func @transform_6(%arg0: i32) -> (i32, i32) {
    %c0_i32 = arith.constant 0 : i32
    %c0_i32_0 = arith.constant 0 : i32
    %c0_i32_1 = arith.constant 0 : i32
    return %c0_i32, %c0_i32_0 : i32, i32
  }
  func.func @transform_7(%arg0: i32) -> (i32, i32) {
    %c0_i32 = arith.constant 0 : i32
    %c0_i32_0 = arith.constant 0 : i32
    return %arg0, %c0_i32 : i32, i32
  }
}

</mosaic_0001>

<llo_original>
// kernel: tpu_custom_call.1
$region0: #{tpu_custom_call.1}
  #allocation0 [shape = 'u32[]', space=smem, size = 0x4, offset = 0x4, fixed_abs, tag = 'smem constant byte address 0x4 - core index']
  #allocation1 [shape = 'u32[72,128]{1,0:T(1,128)}', space=vmem, size = 0x9000, scoped, tag = 'internal scratch']
  %s0 = inlined_call_operand.hbm [shape: f32[16,128], index: 0, kind: input, shape index: {}]
  %s1 = inlined_call_operand.hbm [shape: bf16[128,128], index: 1, kind: input, shape index: {}]
  %s2 = inlined_call_operand.vmem [shape: f32[1,128], index: 2, kind: input, shape index: {}]
  %s3 = inlined_call_operand.hbm [shape: bf16[128,128], index: 3, kind: input, shape index: {}]
  %s4 = inlined_call_operand.vmem [shape: f32[1,128], index: 4, kind: input, shape index: {}]
  %s5 = inlined_call_operand.hbm [shape: bf16[128,128], index: 5, kind: input, shape index: {}]
  %s6 = inlined_call_operand.vmem [shape: f32[1,128], index: 6, kind: input, shape index: {}]
  %s7 = inlined_call_operand.hbm [shape: f32[16,128], index: 7, kind: output, shape index: {}]
  %s8 = sld [smem:[#allocation0]]
  $region54: #{tpu_custom_call.1} parent=0
    _
  %s10 = ssub.s32 1, %s8
  %s11 = scalar_select 0, %s10, %s8
  $region1: #{tpu_custom_call.1} parent=0
    #allocation2 [shape = 'u8[8192]{0}', space=vmem, size = 0x2000, scoped, tag = 'input window, operand 0, single buffered']
    #allocation3 [shape = 's32[1]{0}', space=sflag, size = 0x4, scoped, tag = 'scoped memory for tpu_custom_call.1']
    #allocation4 [shape = 's32[1]{0}', space=sflag, size = 0x4, scoped, tag = 'scoped memory for tpu_custom_call.1']
    #allocation5 [shape = 'u8[32768]{0}', space=vmem, size = 0x8000, scoped, tag = 'input window, operand 1, single buffered']
    #allocation6 [shape = 's32[1]{0}', space=sflag, size = 0x4, scoped, tag = 'scoped memory for tpu_custom_call.1']
    #allocation7 [shape = 'u8[32768]{0}', space=vmem, size = 0x8000, scoped, tag = 'input window, operand 3, single buffered']
    #allocation8 [shape = 'u8[32768]{0}', space=vmem, size = 0x8000, scoped, tag = 'input window, operand 5, single buffered']
    #allocation9 [shape = 's32[1]{0}', space=sflag, size = 0x4, scoped, tag = 'scoped memory for tpu_custom_call.1']
    #allocation10 [shape = 'u8[8192]{0}', space=vmem, size = 0x2000, scoped, tag = 'output window, operand 0, single buffered']
    %12 = vsyncpa [#allocation3], 0
    %13 = vsyncpa [#allocation6], 0
    %14 = vsyncpa [#allocation9], 0
    %15 = vsyncpa [#allocation4], 0
    // Predicated region
    $region2: #{tpu_custom_call.1} parent=1 // pred_check
      _
    $region3: #{tpu_custom_call.1} parent=1 // pred_check_branch
      %17 = sbr.rel (0) target = $region5
    $region4: #{tpu_custom_call.1} parent=1 // pred_region
      %19 = vsyncadd [#allocation3], 0
      %s20 = sshll.u32 %s0, 4
      %s21 = int_to_ptr.hbm [resolvable:$true] %s20
      %s22 = sshll.u32 [#allocation2], 4
      %s23 = int_to_ptr.vmem [resolvable:$true] %s22
      %28 = dma.hbm_to_vmem [thread:$0]  %s21, 256, %s23, [#allocation3], 128, 128, 8
    $region5: #{tpu_custom_call.1} parent=1 // pred_fallthru
      _
    // Predicated region
    $region6: #{tpu_custom_call.1} parent=1 // pred_check
      _
    $region7: #{tpu_custom_call.1} parent=1 // pred_check_branch
      %30 = sbr.rel (0) target = $region9
    $region8: #{tpu_custom_call.1} parent=1 // pred_region
      %32 = vsyncadd [#allocation6], 0
      %s33 = sshll.u32 %s1, 4
      %s34 = int_to_ptr.hbm [resolvable:$true] %s33
      %s35 = sshll.u32 [#allocation5], 4
      %s36 = int_to_ptr.vmem [resolvable:$true] %s35
      %41 = dma.hbm_to_vmem [thread:$0]  %s34, 1024, %s36, [#allocation6], 64, 64, 4
    $region9: #{tpu_custom_call.1} parent=1 // pred_fallthru
      _
    // Predicated region
    $region10: #{tpu_custom_call.1} parent=1 // pred_check
      _
    $region11: #{tpu_custom_call.1} parent=1 // pred_check_branch
      %43 = sbr.rel (0) target = $region13
    $region12: #{tpu_custom_call.1} parent=1 // pred_region
      _
    $region13: #{tpu_custom_call.1} parent=1 // pred_fallthru
      _
    // Predicated region
    $region14: #{tpu_custom_call.1} parent=1 // pred_check
      _
    $region15: #{tpu_custom_call.1} parent=1 // pred_check_branch
      %45 = sbr.rel (0) target = $region17
    $region16: #{tpu_custom_call.1} parent=1 // pred_region
      %47 = vsyncadd [#allocation6], 0
      %s48 = sshll.u32 %s3, 4
      %s49 = int_to_ptr.hbm [resolvable:$true] %s48
      %s50 = sshll.u32 [#allocation7], 4
      %s51 = int_to_ptr.vmem [resolvable:$true] %s50
      %56 = dma.hbm_to_vmem [thread:$0]  %s49, 1024, %s51, [#allocation6], 64, 64, 4
    $region17: #{tpu_custom_call.1} parent=1 // pred_fallthru
      _
    // Predicated region
    $region18: #{tpu_custom_call.1} parent=1 // pred_check
      _
    $region19: #{tpu_custom_call.1} parent=1 // pred_check_branch
      %58 = sbr.rel (0) target = $region21
    $region20: #{tpu_custom_call.1} parent=1 // pred_region
      _
    $region21: #{tpu_custom_call.1} parent=1 // pred_fallthru
      _
    // Predicated region
    $region22: #{tpu_custom_call.1} parent=1 // pred_check
      _
    $region23: #{tpu_custom_call.1} parent=1 // pred_check_branch
      %60 = sbr.rel (0) target = $region25
    $region24: #{tpu_custom_call.1} parent=1 // pred_region
      %62 = vsyncadd [#allocation9], 0
      %s63 = sshll.u32 %s5, 4
      %s64 = int_to_ptr.hbm [resolvable:$true] %s63
      %s65 = sshll.u32 [#allocation8], 4
      %s66 = int_to_ptr.vmem [resolvable:$true] %s65
      %71 = dma.hbm_to_vmem [thread:$0]  %s64, 1024, %s66, [#allocation9], 64, 64, 4
    $region25: #{tpu_custom_call.1} parent=1 // pred_fallthru
      _
    // Predicated region
    $region26: #{tpu_custom_call.1} parent=1 // pred_check
      _
    $region27: #{tpu_custom_call.1} parent=1 // pred_check_branch
      %73 = sbr.rel (0) target = $region29
    $region28: #{tpu_custom_call.1} parent=1 // pred_region
      _
    $region29: #{tpu_custom_call.1} parent=1 // pred_fallthru
      _
    // Predicated region
    $region30: #{tpu_custom_call.1} parent=1 // pred_check
      _
    $region31: #{tpu_custom_call.1} parent=1 // pred_check_branch
      %75 = sbr.rel (0) target = $region33
    $region32: #{tpu_custom_call.1} parent=1 // pred_region
      %77 = dma.done [#allocation3], 256
    $region33: #{tpu_custom_call.1} parent=1 // pred_fallthru
      _
    // Predicated region
    $region34: #{tpu_custom_call.1} parent=1 // pred_check
      _
    $region35: #{tpu_custom_call.1} parent=1 // pred_check_branch
      %79 = sbr.rel (0) target = $region37
    $region36: #{tpu_custom_call.1} parent=1 // pred_region
      %81 = dma.done [#allocation6], 1024
    $region37: #{tpu_custom_call.1} parent=1 // pred_fallthru
      _
    // Predicated region
    $region38: #{tpu_custom_call.1} parent=1 // pred_check
      _
    $region39: #{tpu_custom_call.1} parent=1 // pred_check_branch
      %83 = sbr.rel (0) target = $region41
    $region40: #{tpu_custom_call.1} parent=1 // pred_region
      %85 = dma.done [#allocation6], 1024
    $region41: #{tpu_custom_call.1} parent=1 // pred_fallthru
      _
    // Predicated region
    $region42: #{tpu_custom_call.1} parent=1 // pred_check
      _
    $region43: #{tpu_custom_call.1} parent=1 // pred_check_branch
      %87 = sbr.rel (0) target = $region45
    $region44: #{tpu_custom_call.1} parent=1 // pred_region
      %89 = dma.done [#allocation9], 1024
    $region45: #{tpu_custom_call.1} parent=1 // pred_fallthru
      _
    %v91 = vld [vmem:[#allocation2] sm:$0xff]
    %v92 = vld [vmem:[#allocation2 + $0x8] sm:$0xff]
    %v93 = vpack.c.bf16 %v92, %v91
    %v94 = vld [vmem:[#allocation5] sm:$0xf]
    %v95 = vld [vmem:[#allocation5 + $0x4] sm:$0xf]
    %v96 = vld [vmem:[#allocation5 + $0x8] sm:$0xf]
    %v97 = vld [vmem:[#allocation5 + $0xc] sm:$0xf]
    %v98 = vld [vmem:[#allocation5 + $0x10] sm:$0xf]
    %v99 = vld [vmem:[#allocation5 + $0x14] sm:$0xf]
    %v100 = vld [vmem:[#allocation5 + $0x18] sm:$0xf]
    %v101 = vld [vmem:[#allocation5 + $0x1c] sm:$0xf]
    %v102 = vld [vmem:[#allocation5 + $0x20] sm:$0xf]
    %v103 = vld [vmem:[#allocation5 + $0x24] sm:$0xf]
    %v104 = vld [vmem:[#allocation5 + $0x28] sm:$0xf]
    %v105 = vld [vmem:[#allocation5 + $0x2c] sm:$0xf]
    %v106 = vld [vmem:[#allocation5 + $0x30] sm:$0xf]
    %v107 = vld [vmem:[#allocation5 + $0x34] sm:$0xf]
    %v108 = vld [vmem:[#allocation5 + $0x38] sm:$0xf]
    %v109 = vld [vmem:[#allocation5 + $0x3c] sm:$0xf]
    %v110 = vld [vmem:[%s2] sm:$0x1]
    %v112 = vperm.slane %v110, 0
    %v130 = vunpack.c.l.b16 %v94
    %v131 = vunpack.c.l.b16 %v95
    %v132 = vunpack.c.l.b16 %v96
    %v133 = vunpack.c.l.b16 %v97
    %v134 = vunpack.c.l.b16 %v98
    %v135 = vunpack.c.l.b16 %v99
    %v136 = vunpack.c.l.b16 %v100
    %v137 = vunpack.c.l.b16 %v101
    %v138 = vunpack.c.l.b16 %v102
    %v139 = vunpack.c.l.b16 %v103
    %v140 = vunpack.c.l.b16 %v104
    %v141 = vunpack.c.l.b16 %v105
    %v142 = vunpack.c.l.b16 %v106
    %v143 = vunpack.c.l.b16 %v107
    %v144 = vunpack.c.l.b16 %v108
    %v145 = vunpack.c.l.b16 %v109
    %v146 = vpack.c.b16 %v131, %v130
    %v147 = vpack.c.b16 %v133, %v132
    %v148 = vpack.c.b16 %v135, %v134
    %v149 = vpack.c.b16 %v137, %v136
    %v150 = vpack.c.b16 %v139, %v138
    %v151 = vpack.c.b16 %v141, %v140
    %v152 = vpack.c.b16 %v143, %v142
    %v153 = vpack.c.b16 %v145, %v144
    %162 = vmatpush.bf16.msra.mxu0 %v153
    %163 = vmatpush.bf16.msra.mxu0 %v152
    %164 = vmatpush.bf16.msra.mxu0 %v151
    %165 = vmatpush.bf16.msra.mxu0 %v150
    %166 = vmatpush.bf16.msra.mxu0 %v149
    %167 = vmatpush.bf16.msra.mxu0 %v148
    %168 = vmatpush.bf16.msra.mxu0 %v147
    %169 = vmatpush.bf16.msra.mxu0 %v146
    %170 = vmatmul.bf16.gmra.mxu0 %v93
    %v171 = vpop.f32.mrf.mxu0
    %v172 = vadd.f32 %v112, %v171
    %v173 = vpop.f32.mrf.mxu0
    %v174 = vadd.f32 %v112, %v173
    %175 = vdwg.mxu0
    %v176 = vpack.c.bf16 %v172, %v172
    %v177 = vpack.c.bf16 %v174, %v174
    %v178 = vxor.u32 %v176, 2147516416
    %v179 = vxor.u32 %v177, 2147516416
    %v180 = vunpack.c.l.bf16 %v178
    %v181 = vunpack.c.l.bf16 %v179
    %v182 = vmul.f32 %v180, 1.442695
    %v183 = vpow.pop %v182
    %v184 = vmul.f32 %v181, 1.442695
    %v185 = vpow.pop %v184
    %v186 = vpack.c.bf16 %v183, %v183
    %v187 = vpack.c.bf16 %v185, %v185
    %v188 = vunpack.c.l.bf16 %v186
    %v189 = vunpack.c.l.bf16 %v187
    %v190 = vadd.f32 %v188, 1.0
    %v191 = vadd.f32 %v189, 1.0
    %v192 = vpack.c.bf16 %v190, %v190
    %v193 = vpack.c.bf16 %v191, %v191
    %v194 = vunpack.c.h.bf16 1065369472
    %v195 = vunpack.c.l.bf16 1065369472
    %v196 = vunpack.c.h.bf16 %v192
    %v197 = vunpack.c.l.bf16 %v192
    %v198 = vrcp.pop %v196
    %v199 = vmul.f32 %v194, %v198
    %v200 = vrcp.pop %v197
    %v201 = vmul.f32 %v195, %v200
    %v202 = vpack.c.bf16 %v199, %v201
    %v203 = vunpack.c.h.bf16 %v193
    %v204 = vunpack.c.l.bf16 %v193
    %v205 = vrcp.pop %v203
    %v206 = vmul.f32 %v194, %v205
    %v207 = vrcp.pop %v204
    %v208 = vmul.f32 %v195, %v207
    %v209 = vpack.c.bf16 %v206, %v208
    %v210 = vunpack.c.l.bf16 %v176
    %v211 = vunpack.c.l.bf16 %v177
    %v212 = vunpack.c.l.bf16 %v202
    %v213 = vunpack.c.l.bf16 %v209
    %v214 = vmul.f32 %v210, %v212
    %v215 = vmul.f32 %v211, %v213
    %v216 = vpack.c.bf16 %v215, %v214
    %v217 = vld [vmem:[#allocation7] sm:$0xf]
    %v218 = vld [vmem:[#allocation7 + $0x4] sm:$0xf]
    %v219 = vld [vmem:[#allocation7 + $0x8] sm:$0xf]
    %v220 = vld [vmem:[#allocation7 + $0xc] sm:$0xf]
    %v221 = vld [vmem:[#allocation7 + $0x10] sm:$0xf]
    %v222 = vld [vmem:[#allocation7 + $0x14] sm:$0xf]
    %v223 = vld [vmem:[#allocation7 + $0x18] sm:$0xf]
    %v224 = vld [vmem:[#allocation7 + $0x1c] sm:$0xf]
    %v225 = vld [vmem:[#allocation7 + $0x20] sm:$0xf]
    %v226 = vld [vmem:[#allocation7 + $0x24] sm:$0xf]
    %v227 = vld [vmem:[#allocation7 + $0x28] sm:$0xf]
    %v228 = vld [vmem:[#allocation7 + $0x2c] sm:$0xf]
    %v229 = vld [vmem:[#allocation7 + $0x30] sm:$0xf]
    %v230 = vld [vmem:[#allocation7 + $0x34] sm:$0xf]
    %v231 = vld [vmem:[#allocation7 + $0x38] sm:$0xf]
    %v232 = vld [vmem:[#allocation7 + $0x3c] sm:$0xf]
    %v233 = vld [vmem:[%s4] sm:$0x1]
    %v235 = vperm.slane %v233, 0
    %v253 = vunpack.c.l.b16 %v217
    %v254 = vunpack.c.l.b16 %v218
    %v255 = vunpack.c.l.b16 %v219
    %v256 = vunpack.c.l.b16 %v220
    %v257 = vunpack.c.l.b16 %v221
    %v258 = vunpack.c.l.b16 %v222
    %v259 = vunpack.c.l.b16 %v223
    %v260 = vunpack.c.l.b16 %v224
    %v261 = vunpack.c.l.b16 %v225
    %v262 = vunpack.c.l.b16 %v226
    %v263 = vunpack.c.l.b16 %v227
    %v264 = vunpack.c.l.b16 %v228
    %v265 = vunpack.c.l.b16 %v229
    %v266 = vunpack.c.l.b16 %v230
    %v267 = vunpack.c.l.b16 %v231
    %v268 = vunpack.c.l.b16 %v232
    %v269 = vpack.c.b16 %v254, %v253
    %v270 = vpack.c.b16 %v256, %v255
    %v271 = vpack.c.b16 %v258, %v257
    %v272 = vpack.c.b16 %v260, %v259
    %v273 = vpack.c.b16 %v262, %v261
    %v274 = vpack.c.b16 %v264, %v263
    %v275 = vpack.c.b16 %v266, %v265
    %v276 = vpack.c.b16 %v268, %v267
    %285 = vmatpush.bf16.msra.mxu0 %v276
    %286 = vmatpush.bf16.msra.mxu0 %v275
    %287 = vmatpush.bf16.msra.mxu0 %v274
    %288 = vmatpush.bf16.msra.mxu0 %v273
    %289 = vmatpush.bf16.msra.mxu0 %v272
    %290 = vmatpush.bf16.msra.mxu0 %v271
    %291 = vmatpush.bf16.msra.mxu0 %v270
    %292 = vmatpush.bf16.msra.mxu0 %v269
    %293 = vmatmul.bf16.gmra.mxu0 %v216
    %v294 = vpop.f32.mrf.mxu0
    %v295 = vadd.f32 %v235, %v294
    %v296 = vpop.f32.mrf.mxu0
    %v297 = vadd.f32 %v235, %v296
    %298 = vdwg.mxu0
    %v299 = vpack.c.bf16 %v295, %v295
    %v300 = vpack.c.bf16 %v297, %v297
    %v301 = vxor.u32 %v299, 2147516416
    %v302 = vxor.u32 %v300, 2147516416
    %v303 = vunpack.c.l.bf16 %v301
    %v304 = vunpack.c.l.bf16 %v302
    %v305 = vmul.f32 %v303, 1.442695
    %v306 = vpow.pop %v305
    %v307 = vmul.f32 %v304, 1.442695
    %v308 = vpow.pop %v307
    %v309 = vpack.c.bf16 %v306, %v306
    %v310 = vpack.c.bf16 %v308, %v308
    %v311 = vunpack.c.l.bf16 %v309
    %v312 = vunpack.c.l.bf16 %v310
    %v313 = vadd.f32 %v311, 1.0
    %v314 = vadd.f32 %v312, 1.0
    %v315 = vpack.c.bf16 %v313, %v313
    %v316 = vpack.c.bf16 %v314, %v314
    %v317 = vunpack.c.h.bf16 %v315
    %v318 = vunpack.c.l.bf16 %v315
    %v319 = vrcp.pop %v317
    %v320 = vmul.f32 %v194, %v319
    %v321 = vrcp.pop %v318
    %v322 = vmul.f32 %v195, %v321
    %v323 = vpack.c.bf16 %v320, %v322
    %v324 = vunpack.c.h.bf16 %v316
    %v325 = vunpack.c.l.bf16 %v316
    %v326 = vrcp.pop %v324
    %v327 = vmul.f32 %v194, %v326
    %v328 = vrcp.pop %v325
    %v329 = vmul.f32 %v195, %v328
    %v330 = vpack.c.bf16 %v327, %v329
    %v331 = vunpack.c.l.bf16 %v299
    %v332 = vunpack.c.l.bf16 %v300
    %v333 = vunpack.c.l.bf16 %v323
    %v334 = vunpack.c.l.bf16 %v330
    %v335 = vmul.f32 %v331, %v333
    %v336 = vmul.f32 %v332, %v334
    %v337 = vpack.c.bf16 %v336, %v335
    %v338 = vld [vmem:[#allocation8] sm:$0xf]
    %v339 = vld [vmem:[#allocation8 + $0x4] sm:$0xf]
    %v340 = vld [vmem:[#allocation8 + $0x8] sm:$0xf]
    %v341 = vld [vmem:[#allocation8 + $0xc] sm:$0xf]
    %v342 = vld [vmem:[#allocation8 + $0x10] sm:$0xf]
    %v343 = vld [vmem:[#allocation8 + $0x14] sm:$0xf]
    %v344 = vld [vmem:[#allocation8 + $0x18] sm:$0xf]
    %v345 = vld [vmem:[#allocation8 + $0x1c] sm:$0xf]
    %v346 = vld [vmem:[#allocation8 + $0x20] sm:$0xf]
    %v347 = vld [vmem:[#allocation8 + $0x24] sm:$0xf]
    %v348 = vld [vmem:[#allocation8 + $0x28] sm:$0xf]
    %v349 = vld [vmem:[#allocation8 + $0x2c] sm:$0xf]
    %v350 = vld [vmem:[#allocation8 + $0x30] sm:$0xf]
    %v351 = vld [vmem:[#allocation8 + $0x34] sm:$0xf]
    %v352 = vld [vmem:[#allocation8 + $0x38] sm:$0xf]
    %v353 = vld [vmem:[#allocation8 + $0x3c] sm:$0xf]
    %v354 = vld [vmem:[%s6] sm:$0x1]
    %v356 = vperm.slane %v354, 0
    %v374 = vunpack.c.l.b16 %v338
    %v375 = vunpack.c.l.b16 %v339
    %v376 = vunpack.c.l.b16 %v340
    %v377 = vunpack.c.l.b16 %v341
    %v378 = vunpack.c.l.b16 %v342
    %v379 = vunpack.c.l.b16 %v343
    %v380 = vunpack.c.l.b16 %v344
    %v381 = vunpack.c.l.b16 %v345
    %v382 = vunpack.c.l.b16 %v346
    %v383 = vunpack.c.l.b16 %v347
    %v384 = vunpack.c.l.b16 %v348
    %v385 = vunpack.c.l.b16 %v349
    %v386 = vunpack.c.l.b16 %v350
    %v387 = vunpack.c.l.b16 %v351
    %v388 = vunpack.c.l.b16 %v352
    %v389 = vunpack.c.l.b16 %v353
    %v390 = vpack.c.b16 %v375, %v374
    %v391 = vpack.c.b16 %v377, %v376
    %v392 = vpack.c.b16 %v379, %v378
    %v393 = vpack.c.b16 %v381, %v380
    %v394 = vpack.c.b16 %v383, %v382
    %v395 = vpack.c.b16 %v385, %v384
    %v396 = vpack.c.b16 %v387, %v386
    %v397 = vpack.c.b16 %v389, %v388
    %406 = vmatpush.bf16.msra.mxu0 %v397
    %407 = vmatpush.bf16.msra.mxu0 %v396
    %408 = vmatpush.bf16.msra.mxu0 %v395
    %409 = vmatpush.bf16.msra.mxu0 %v394
    %410 = vmatpush.bf16.msra.mxu0 %v393
    %411 = vmatpush.bf16.msra.mxu0 %v392
    %412 = vmatpush.bf16.msra.mxu0 %v391
    %413 = vmatpush.bf16.msra.mxu0 %v390
    %414 = vmatmul.bf16.gmra.mxu0 %v337
    %v415 = vpop.f32.mrf.mxu0
    %v416 = vadd.f32 %v356, %v415
    %v417 = vpop.f32.mrf.mxu0
    %v418 = vadd.f32 %v356, %v417
    %419 = vdwg.mxu0
    %420 = vst [vmem:[#allocation10] sm:$0xff] %v416
    %421 = vst [vmem:[#allocation10 + $0x8] sm:$0xff] %v418
    // Predicated region
    $region46: #{tpu_custom_call.1} parent=1 // pred_check
      _
    $region47: #{tpu_custom_call.1} parent=1 // pred_check_branch
      %423 = sbr.rel (0) target = $region49
    $region48: #{tpu_custom_call.1} parent=1 // pred_region
      %425 = vsyncadd [#allocation4], 0
      %s426 = sshll.u32 [#allocation10], 4
      %s427 = int_to_ptr.vmem [resolvable:$true] %s426
      %s428 = sshll.u32 %s7, 4
      %s429 = int_to_ptr.hbm [resolvable:$true] %s428
      %434 = dma.vmem_to_hbm [thread:$0]  %s427, 256, %s429, [#allocation4], 128, 128, 8
    $region49: #{tpu_custom_call.1} parent=1 // pred_fallthru
      _
    // Predicated region
    $region50: #{tpu_custom_call.1} parent=1 // pred_check
      _
    $region51: #{tpu_custom_call.1} parent=1 // pred_check_branch
      %436 = sbr.rel (0) target = $region53
    $region52: #{tpu_custom_call.1} parent=1 // pred_region
      %438 = dma.done [#allocation4], 256
    $region53: #{tpu_custom_call.1} parent=1 // pred_fallthru
      _
    %439 = vsyncpa [#allocation3], 1
    %440 = vsyncpa [#allocation6], 1
    %441 = vsyncpa [#allocation9], 1
    %442 = vsyncpa [#allocation4], 1

</llo_original>
